<compile_context>
chip_gen: v7x
topology: tpu7x:2x2x1
jax: 0.10.0
libtpu: 0.0.40
codegen_flags: <defaults>
</compile_context>

<pallas_src>
import jax
import jax.numpy as jnp
from jax import lax
from jax.experimental import pallas as pl
from jax.experimental.pallas import tpu as pltpu


def _round_up(x, m):
    return (x + m - 1) // m * m


def _move_tokenizer_kernel(x_ref, w_ref, b_ref, o_ref):
    # x: (tile_m, K); w: (N, K) native torch layout; b: (N, 1); o: (N, tile_m).
    # Contract K of W with K of X  ==  W @ X^T  (fused weight transpose,
    # lane-dense output), f32 accumulation on the MXU.
    acc = lax.dot_general(
        w_ref[...], x_ref[...],
        dimension_numbers=(((1,), (1,)), ((), ())),
        preferred_element_type=jnp.float32,
    )
    o_ref[...] = (acc + b_ref[...]).astype(o_ref.dtype)


def move_tokenizer(moves, weight, bias, *, block_m=1024, xla_fallback_m=256,
                   return_transposed=False, force_pallas=False):
    """moves: (M, K) f32; weight: (N, K) f32 (torch nn.Linear layout); bias: (N,) f32.

    Returns (M, N) f32 (or (N, M) if return_transposed=True).
    """
    M, K = moves.shape
    N, K2 = weight.shape
    assert K == K2, (K, K2)
    assert bias.shape == (N,), bias.shape

    # Nominal tiny-M use: let XLA fuse the linear with its neighbours; the
    # pallas_call boundary + DMA setup would cost more than the work.
    if M <= xla_fallback_m and not force_pallas:
        y = moves @ weight.T + bias
        return y.T if return_transposed else y

    b2 = bias.reshape(N, 1)  # broadcast along lanes inside the kernel

    # Tile size: as big as reasonable (mem-bound kernel), but shrunk so the
    # grid has >= 2 steps -> the "parallel" M axis shards across v7x's 2 TCs.
    bm = max(128, _round_up(block_m, 128))
    bm = min(bm, max(128, _round_up(pl.cdiv(M, 2), 128)))
    num_steps = pl.cdiv(M, bm)

    if num_steps >= 3:
        # Third input buffer keeps two DMAs in flight (pipeline is pure DMA).
        x_spec = pl.BlockSpec((bm, K), lambda i: (i, 0),
                              pipeline_mode=pl.Buffered(3))
        n_x_buf = 3
    else:
        x_spec = pl.BlockSpec((bm, K), lambda i: (i, 0))
        n_x_buf = 2

    # Padded VMEM footprint estimate; only override the scoped limit when a
    # large user block_m would overshoot v5e's 16 MiB scoped default.
    k_pad, n_pad = _round_up(K, 128), _round_up(N, 8)
    vmem_bytes = 4 * (n_x_buf * bm * k_pad      # moves buffers (lane-padded)
                      + 2 * n_pad * bm          # output buffers
                      + 2 * n_pad * k_pad       # weight buffers
                      + 2 * n_pad * 128)        # bias buffers
    comp_kwargs = dict(dimension_semantics=("parallel",))
    if vmem_bytes > 12 * 1024 * 1024:
        comp_kwargs["vmem_limit_bytes"] = min(2 * vmem_bytes, 48 * 1024 * 1024)

    cost = pl.CostEstimate(
        flops=2 * M * K * N,
        transcendentals=0,
        bytes_accessed=4 * (M * K + N * K + N + M * N),
    )

    out_t = pl.pallas_call(
        _move_tokenizer_kernel,
        out_shape=jax.ShapeDtypeStruct((N, M), jnp.float32),
        grid=(num_steps,),
        in_specs=[
            x_spec,                                   # moves tile (bm, K)
            pl.BlockSpec((N, K), lambda i: (0, 0)),   # weight resident
            pl.BlockSpec((N, 1), lambda i: (0, 0)),   # bias resident
        ],
        out_specs=pl.BlockSpec((N, bm), lambda i: (0, i)),  # lane-dense slab
        compiler_params=pltpu.CompilerParams(**comp_kwargs),
        cost_estimate=cost,
    )(moves, weight, b2)

    return out_t if return_transposed else out_t.T


if __name__ == "__main__":
    input_dim, output_dim = 136, 14

    key = jax.random.PRNGKey(0)
    k_w, k_b, k_x1, k_x2, k_x3 = jax.random.split(key, 5)

    # Deterministic params mirroring nn.Linear's uniform(-1/sqrt(K), 1/sqrt(K)).
    bound = 1.0 / jnp.sqrt(jnp.float32(input_dim))
    weight = jax.random.uniform(k_w, (output_dim, input_dim), jnp.float32,
                                minval=-bound, maxval=bound)
    bias = jax.random.uniform(k_b, (output_dim,), jnp.float32,
                              minval=-bound, maxval=bound)

    def ref_fn(x):
        return x @ weight.T + bias

    # 1) Nominal tiny batch: exercises both the fused-XLA fallback and the
    #    Pallas kernel (force_pallas) on the same data.
    moves_small = jax.random.normal(k_x1, (8, input_dim), jnp.float32)
    out_fb = jax.block_until_ready(move_tokenizer(moves_small, weight, bias))
    out_pl = jax.block_until_ready(
        move_tokenizer(moves_small, weight, bias, force_pallas=True))
    ref_s = ref_fn(moves_small)
    assert out_fb.shape == (8, output_dim) and out_pl.shape == (8, output_dim)
    assert jnp.allclose(out_fb, ref_s, atol=1e-4, rtol=1e-4)
    assert jnp.allclose(out_pl, ref_s, atol=1e-4, rtol=1e-4)

    # 2) Mid batch: 2 grid steps of 256 rows (both TCs participate on v7x).
    moves_mid = jax.random.normal(k_x2, (512, input_dim), jnp.float32)
    out_mid = jax.block_until_ready(move_tokenizer(moves_mid, weight, bias))
    assert out_mid.shape == (512, output_dim)
    assert jnp.allclose(out_mid, ref_fn(moves_mid), atol=1e-4, rtol=1e-4)

    # 3) Ragged batch with a small block: 4 grid steps -> Buffered(3) path,
    #    partial last tile exercises output masking on the lane-dense slab.
    moves_big = jax.random.normal(k_x3, (1000, input_dim), jnp.float32)
    out_big = jax.block_until_ready(
        move_tokenizer(moves_big, weight, bias, block_m=256))
    assert out_big.shape == (1000, output_dim)
    assert jnp.allclose(out_big, ref_fn(moves_big), atol=1e-4, rtol=1e-4)

    print("KERNEL_OK")
</pallas_src>

<mosaic_0001>
module attributes {stable_mosaic.version = 11 : i64} {
  func.func @_move_tokenizer_kernel(%arg0: i32, %arg1: memref<128x136xf32, #tpu.memory_space<vmem>>, %arg2: memref<14x136xf32, #tpu.memory_space<vmem>>, %arg3: memref<14x1xf32, #tpu.memory_space<vmem>>, %arg4: memref<14x128xf32, #tpu.memory_space<vmem>>) attributes {dimension_semantics = [#tpu.dimension_semantics<parallel>], iteration_bounds = array<i64: 1>, scalar_prefetch = 0 : i64, scratch_operands = 0 : i64, tpu.core_type = #tpu.core_type<tc>, window_params = [{transform_indices = @transform_0, window_bounds = array<i64: 128, 136>}, {pipeline_mode = #tpu.pipeline_mode<synchronous>, transform_indices = @transform_1, window_bounds = array<i64: 14, 136>}, {pipeline_mode = #tpu.pipeline_mode<synchronous>, transform_indices = @transform_2, window_bounds = array<i64: 14, 1>}, {transform_indices = @transform_3, window_bounds = array<i64: 14, 128>}]} {
    %c0 = arith.constant 0 : index
    %c0_0 = arith.constant 0 : index
    %0 = vector.load %arg2[%c0, %c0_0] : memref<14x136xf32, #tpu.memory_space<vmem>>, vector<14x136xf32>
    %c0_1 = arith.constant 0 : index
    %c0_2 = arith.constant 0 : index
    %1 = vector.load %arg1[%c0_1, %c0_2] : memref<128x136xf32, #tpu.memory_space<vmem>>, vector<128x136xf32>
    %cst = arith.constant dense<0.000000e+00> : vector<14x128xf32>
    %2 = tpu.matmul %0, %1, %cst {dimension_numbers = #tpu.dot_dimension_numbers<[1], [1], [0], [0], [0, 0, 1, 0], [], []>} : vector<14x136xf32>, vector<128x136xf32>, vector<14x128xf32> -> vector<14x128xf32>
    %c0_3 = arith.constant 0 : index
    %c0_4 = arith.constant 0 : index
    %3 = vector.load %arg3[%c0_3, %c0_4] : memref<14x1xf32, #tpu.memory_space<vmem>>, vector<14x1xf32>
    %4 = vector.broadcast %3 : vector<14x1xf32> to vector<14x128xf32>
    %5 = arith.addf %2, %4 : vector<14x128xf32>
    %c0_5 = arith.constant 0 : index
    %c0_6 = arith.constant 0 : index
    %6 = vector.load %arg4[%c0_5, %c0_6] : memref<14x128xf32, #tpu.memory_space<vmem>>, vector<14x128xf32>
    tpu.vector_store %arg4[%c0_5, %c0_6], %5 {strides = array<i32>} : memref<14x128xf32, #tpu.memory_space<vmem>>, vector<14x128xf32>,
    return
  }
  func.func @transform_0(%arg0: i32) -> (i32, i32) {
    %c0_i32 = arith.constant 0 : i32
    %c0_i32_0 = arith.constant 0 : i32
    return %arg0, %c0_i32 : i32, i32
  }
  func.func @transform_1(%arg0: i32) -> (i32, i32) {
    %c0_i32 = arith.constant 0 : i32
    %c0_i32_0 = arith.constant 0 : i32
    %c0_i32_1 = arith.constant 0 : i32
    return %c0_i32, %c0_i32_0 : i32, i32
  }
  func.func @transform_2(%arg0: i32) -> (i32, i32) {
    %c0_i32 = arith.constant 0 : i32
    %c0_i32_0 = arith.constant 0 : i32
    %c0_i32_1 = arith.constant 0 : i32
    return %c0_i32, %c0_i32_0 : i32, i32
  }
  func.func @transform_3(%arg0: i32) -> (i32, i32) {
    %c0_i32 = arith.constant 0 : i32
    %c0_i32_0 = arith.constant 0 : i32
    return %c0_i32, %arg0 : i32, i32
  }
}

</mosaic_0001>

<llo_original>
// kernel: tpu_custom_call.1
$region0: #{tpu_custom_call.1}
  #allocation0 [shape = 'u32[]', space=smem, size = 0x4, offset = 0x4, fixed_abs, tag = 'smem constant byte address 0x4 - core index']
  #allocation1 [shape = 'u32[144,128]{1,0:T(1,128)}', space=vmem, size = 0x12000, scoped, tag = 'internal scratch']
  %s0 = inlined_call_operand.vmem [shape: f32[8,136], index: 0, kind: input, shape index: {}]
  %s1 = inlined_call_operand.hbm [shape: f32[14,136], index: 1, kind: input, shape index: {}]
  %s2 = inlined_call_operand.vmem [shape: f32[14,1], index: 2, kind: input, shape index: {}]
  %s3 = inlined_call_operand.vmem [shape: f32[14,8], index: 3, kind: output, shape index: {}]
  %s4 = sld [smem:[#allocation0]]
  $region26: #{tpu_custom_call.1} parent=0
    _
  %s6 = ssub.s32 1, %s4
  %s7 = scalar_select 0, %s6, %s4
  $region1: #{tpu_custom_call.1} parent=0
    #allocation2 [shape = 'u8[16384]{0}', space=vmem, size = 0x4000, scoped, tag = 'input window, operand 1, single buffered']
    #allocation3 [shape = 's32[1]{0}', space=sflag, size = 0x4, scoped, tag = 'scoped memory for tpu_custom_call.1']
    %8 = vsyncpa [#allocation3], 0
    // Predicated region
    $region2: #{tpu_custom_call.1} parent=1 // pred_check
      _
    $region3: #{tpu_custom_call.1} parent=1 // pred_check_branch
      %10 = sbr.rel (0) target = $region5
    $region4: #{tpu_custom_call.1} parent=1 // pred_region
      _
    $region5: #{tpu_custom_call.1} parent=1 // pred_fallthru
      _
    // Predicated region
    $region6: #{tpu_custom_call.1} parent=1 // pred_check
      _
    $region7: #{tpu_custom_call.1} parent=1 // pred_check_branch
      %12 = sbr.rel (0) target = $region9
    $region8: #{tpu_custom_call.1} parent=1 // pred_region
      %s14 = ssub.s32 512, 512
      %15 = vsyncadd [#allocation3], %s14
      %s16 = sshll.u32 [#allocation2], 4
      %s17 = int_to_ptr.vmem [resolvable:$true] %s16
      %22 = dma.hbm_to_vmem [thread:$0]  %s1, 512, %s17, [#allocation3], 256, 256, 16
    $region9: #{tpu_custom_call.1} parent=1 // pred_fallthru
      _
    // Predicated region
    $region10: #{tpu_custom_call.1} parent=1 // pred_check
      _
    $region11: #{tpu_custom_call.1} parent=1 // pred_check_branch
      %24 = sbr.rel (0) target = $region13
    $region12: #{tpu_custom_call.1} parent=1 // pred_region
      _
    $region13: #{tpu_custom_call.1} parent=1 // pred_fallthru
      _
    // Predicated region
    $region14: #{tpu_custom_call.1} parent=1 // pred_check
      _
    $region15: #{tpu_custom_call.1} parent=1 // pred_check_branch
      %26 = sbr.rel (0) target = $region17
    $region16: #{tpu_custom_call.1} parent=1 // pred_region
      %27 = dma.done [#allocation3], 512
    $region17: #{tpu_custom_call.1} parent=1 // pred_fallthru
      _
    %v28 = vld [vmem:[#allocation2] sm:$0xff]
    %v29 = vld [vmem:[#allocation2 + $0x8] sm:$0xff]
    %v30 = vld [vmem:[#allocation2 + $0x10] sm:$0x3f]
    %v31 = vld [vmem:[#allocation2 + $0x18] sm:$0x3f]
    %v32 = vld [vmem:[%s0] sm:$0xff]
    %v33 = vld [vmem:[%s0 + $0x8] sm:$0xff]
    %v34 = vld [vmem:[%s0 + $0x10] sm:$0xff]
    %v35 = vld [vmem:[%s0 + $0x18] sm:$0xff]
    %v36 = vld [vmem:[%s0 + $0x20] sm:$0xff]
    %v37 = vld [vmem:[%s0 + $0x28] sm:$0xff]
    %v38 = vld [vmem:[%s0 + $0x30] sm:$0xff]
    %v39 = vld [vmem:[%s0 + $0x38] sm:$0xff]
    %v40 = vld [vmem:[%s0 + $0x40] sm:$0xff]
    %v41 = vld [vmem:[%s0 + $0x48] sm:$0xff]
    %v42 = vld [vmem:[%s0 + $0x50] sm:$0xff]
    %v43 = vld [vmem:[%s0 + $0x58] sm:$0xff]
    %v44 = vld [vmem:[%s0 + $0x60] sm:$0xff]
    %v45 = vld [vmem:[%s0 + $0x68] sm:$0xff]
    %v46 = vld [vmem:[%s0 + $0x70] sm:$0xff]
    %v47 = vld [vmem:[%s0 + $0x78] sm:$0xff]
    %v48 = vld [vmem:[%s0 + $0x80] sm:$0xff]
    %v49 = vld [vmem:[%s0 + $0x88] sm:$0xff]
    %v50 = vld [vmem:[%s0 + $0x90] sm:$0xff]
    %v51 = vld [vmem:[%s0 + $0x98] sm:$0xff]
    %v52 = vld [vmem:[%s0 + $0xa0] sm:$0xff]
    %v53 = vld [vmem:[%s0 + $0xa8] sm:$0xff]
    %v54 = vld [vmem:[%s0 + $0xb0] sm:$0xff]
    %v55 = vld [vmem:[%s0 + $0xb8] sm:$0xff]
    %v56 = vld [vmem:[%s0 + $0xc0] sm:$0xff]
    %v57 = vld [vmem:[%s0 + $0xc8] sm:$0xff]
    %v58 = vld [vmem:[%s0 + $0xd0] sm:$0xff]
    %v59 = vld [vmem:[%s0 + $0xd8] sm:$0xff]
    %v60 = vld [vmem:[%s0 + $0xe0] sm:$0xff]
    %v61 = vld [vmem:[%s0 + $0xe8] sm:$0xff]
    %v62 = vld [vmem:[%s0 + $0xf0] sm:$0xff]
    %v63 = vld [vmem:[%s0 + $0xf8] sm:$0xff]
    %v64 = vld [vmem:[%s2] sm:$0xff]
    %v65 = vld [vmem:[%s2 + $0x8] sm:$0x3f]
    %67 = vset.pattern.permute.xlu0 0
    %68 = vperm.xlu0 %67, %v64
    %v69 = vpop.permute.xlu0 %68
    %72 = vset.pattern.permute.xlu0 0
    %73 = vperm.xlu0 %72, %v65
    %v74 = vpop.permute.xlu0 %73
    %vm76 = vcmask 64512
    %v78 = vsel %vm76, %v29, 0
    %v81 = vsel %vm76, %v31, 0
    %v84 = vsel %vm76, %v33, 0
    %v87 = vsel %vm76, %v35, 0
    %v90 = vsel %vm76, %v37, 0
    %v93 = vsel %vm76, %v39, 0
    %v96 = vsel %vm76, %v41, 0
    %v99 = vsel %vm76, %v43, 0
    %v102 = vsel %vm76, %v45, 0
    %v105 = vsel %vm76, %v47, 0
    %v108 = vsel %vm76, %v49, 0
    %v111 = vsel %vm76, %v51, 0
    %v114 = vsel %vm76, %v53, 0
    %v117 = vsel %vm76, %v55, 0
    %v120 = vsel %vm76, %v57, 0
    %v123 = vsel %vm76, %v59, 0
    %v126 = vsel %vm76, %v61, 0
    %v129 = vsel %vm76, %v63, 0
    %131 = vmatprep.subr.mxu0 %v84
    %132 = vmatpush1.xpose.msra.mxu0 %v32
    %133 = vmatprep.subr.mxu0 %v87
    %134 = vmatpush1.xpose.msra.mxu0 %v34
    %135 = vmatprep.subr.mxu0 %v90
    %136 = vmatpush1.xpose.msra.mxu0 %v36
    %137 = vmatprep.subr.mxu0 %v93
    %138 = vmatpush1.xpose.msra.mxu0 %v38
    %139 = vmatprep.subr.mxu0 %v96
    %140 = vmatpush1.xpose.msra.mxu0 %v40
    %141 = vmatprep.subr.mxu0 %v99
    %142 = vmatpush1.xpose.msra.mxu0 %v42
    %143 = vmatprep.subr.mxu0 %v102
    %144 = vmatpush1.xpose.msra.mxu0 %v44
    %145 = vmatprep.subr.mxu0 %v105
    %146 = vmatpush1.xpose.msra.mxu0 %v46
    %147 = vmatprep.subr.mxu0 %v108
    %148 = vmatpush1.xpose.msra.mxu0 %v48
    %149 = vmatprep.subr.mxu0 %v111
    %150 = vmatpush1.xpose.msra.mxu0 %v50
    %151 = vmatprep.subr.mxu0 %v114
    %152 = vmatpush1.xpose.msra.mxu0 %v52
    %153 = vmatprep.subr.mxu0 %v117
    %154 = vmatpush1.xpose.msra.mxu0 %v54
    %155 = vmatprep.subr.mxu0 %v120
    %156 = vmatpush1.xpose.msra.mxu0 %v56
    %157 = vmatprep.subr.mxu0 %v123
    %158 = vmatpush1.xpose.msra.mxu0 %v58
    %159 = vmatprep.subr.mxu0 %v126
    %160 = vmatpush1.xpose.msra.mxu0 %v60
    %161 = vmatprep.subr.mxu0 %v129
    %162 = vmatpush1.xpose.msra.mxu0 %v62
    %163 = vmatprep.subr.mxu0 0.0
    %164 = vmatpush1.xpose.msra.mxu0 0.0
    %165 = vmatprep.subr.mxu0 0.0
    %166 = vmatpush1.xpose.msra.mxu0 0.0
    %167 = vmatprep.subr.mxu0 0.0
    %168 = vmatpush1.xpose.msra.mxu0 0.0
    %169 = vmatprep.subr.mxu0 0.0
    %170 = vmatpush1.xpose.msra.mxu0 0.0
    %171 = vmatprep.subr.mxu0 0.0
    %172 = vmatpush1.xpose.msra.mxu0 0.0
    %173 = vmatprep.subr.mxu0 0.0
    %174 = vmatpush1.xpose.msra.mxu0 0.0
    %175 = vmatprep.subr.mxu0 0.0
    %176 = vmatpush1.xpose.msra.mxu0 0.0
    %177 = vmatprep.subr.mxu0 0.0
    %178 = vmatpush1.xpose.msra.mxu0 0.0
    %179 = vmatprep.subr.mxu0 0.0
    %180 = vmatpush1.xpose.msra.mxu0 0.0
    %181 = vmatprep.subr.mxu0 0.0
    %182 = vmatpush1.xpose.msra.mxu0 0.0
    %183 = vmatprep.subr.mxu0 0.0
    %184 = vmatpush1.xpose.msra.mxu0 0.0
    %185 = vmatprep.subr.mxu0 0.0
    %186 = vmatpush1.xpose.msra.mxu0 0.0
    %187 = vmatprep.subr.mxu0 0.0
    %188 = vmatpush1.xpose.msra.mxu0 0.0
    %189 = vmatprep.subr.mxu0 0.0
    %190 = vmatpush1.xpose.msra.mxu0 0.0
    %191 = vmatprep.subr.mxu0 0.0
    %192 = vmatpush1.xpose.msra.mxu0 0.0
    %193 = vmatprep.subr.mxu0 0.0
    %194 = vmatpush1.xpose.msra.mxu0 0.0
    %195 = vmatprep.mubr.f32.mxu0 %v78
    %196 = vmatmul.mubr.f32.gmra.mrb[0].mxu0 %v28
    %v197 = vpop.f32.mrb[0].mxu0
    %v198 = vadd.f32 %v69, %v197
    %v199 = vpop.f32.mrb[0].mxu0
    %200 = vmatprep.mubr.f32.mxu0 %v81
    %201 = vmatmul.mubr.f32.gmra.mrb[0].mxu0 %v30
    %v202 = vpop.f32.mrb[0].mxu0
    %v203 = vadd.f32 %v74, %v202
    %v204 = vpop.f32.mrb[0].mxu0
    %205 = vdwg.mxu0
    %206 = vst [vmem:[%s3] sm:$0xff] %v198
    %207 = vst [vmem:[%s3 + $0x8] sm:$0x3f] %v203
    // Predicated region
    $region18: #{tpu_custom_call.1} parent=1 // pred_check
      _
    $region19: #{tpu_custom_call.1} parent=1 // pred_check_branch
      %209 = sbr.rel (0) target = $region21
    $region20: #{tpu_custom_call.1} parent=1 // pred_region
      _
    $region21: #{tpu_custom_call.1} parent=1 // pred_fallthru
      _
    // Predicated region
    $region22: #{tpu_custom_call.1} parent=1 // pred_check
      _
    $region23: #{tpu_custom_call.1} parent=1 // pred_check_branch
      %211 = sbr.rel (0) target = $region25
    $region24: #{tpu_custom_call.1} parent=1 // pred_region
      _
    $region25: #{tpu_custom_call.1} parent=1 // pred_fallthru
      _
    %212 = vsyncpa [#allocation3], 1

</llo_original>
